<compile_context>
chip_gen: v6e
topology: v6e:2x2x1
jax: 0.10.0
libtpu: 0.0.40
codegen_flags: <defaults>
</compile_context>

<pallas_src>
import numpy as np
import jax
import jax.numpy as jnp
from jax.experimental import pallas as pl
from jax.experimental.pallas import tpu as pltpu


def _round_up(x, m):
    return ((x + m - 1) // m) * m


# ----------------------------------------------------------------------------
# Pallas kernel + launcher (batch on the lane axis)
# ----------------------------------------------------------------------------
def _dynamics_mlp_pallas(x_cat_t, params, feat_dim):
    """x_cat_t: (feat_dim + act_dim, B) f32, batch on lanes.
    Returns (out_dim, B) f32 = MLP(x_cat) + x_sel (residual), batch on lanes."""
    K, B = x_cat_t.shape
    hid = params["w2_t"].shape[0]
    out_dim = params["w4_t"].shape[0]

    # Adaptive batch tile (lane axis, multiple of 128):
    #  - big tiles (<=2048) to amortize per-grid-step pipelining overhead,
    #  - sized from ceil(B / n_tiles) so unlucky B values don't double padding,
    #  - >= 2 tiles once B is large enough so v7x's 2 TensorCores split the batch
    #    (free on v5e/v6e).
    TB_MAX = 2048
    n_tiles = -(-B // TB_MAX)
    if B >= 256:
        n_tiles = max(n_tiles, 2)
    TB = _round_up(-(-B // n_tiles), 128)
    Bp = TB * n_tiles
    if Bp != B:
        x_cat_t = jnp.pad(x_cat_t, ((0, 0), (0, Bp - B)))
    grid = (Bp // TB,)

    def kernel(xcat_ref, w1_ref, b1_ref, w2_ref, b2_ref,
               w3_ref, b3_ref, w4_ref, b4_ref, out_ref):
        xcat = xcat_ref[...]                                   # (K, TB), batch on lanes
        h = jnp.dot(w1_ref[...], xcat,
                    preferred_element_type=jnp.float32) + b1_ref[...]
        h = jnp.maximum(h, 0.0)
        h = jnp.maximum(jnp.dot(w2_ref[...], h,
                                preferred_element_type=jnp.float32) + b2_ref[...], 0.0)
        h = jnp.maximum(jnp.dot(w3_ref[...], h,
                                preferred_element_type=jnp.float32) + b3_ref[...], 0.0)
        diff = jnp.dot(w4_ref[...], h,
                       preferred_element_type=jnp.float32) + b4_ref[...]
        # Residual: x_prev == x_sel == first feat_dim rows of the resident tile
        # (feat_dim is a multiple of 8, so this slice stays sublane-aligned).
        out_ref[...] = diff + xcat[:feat_dim, :]

    def batch_spec(rows):
        return pl.BlockSpec((rows, TB), lambda i: (0, i))

    def resident_spec(arr):
        # Same block index every grid step -> stays resident in VMEM (no re-DMA).
        return pl.BlockSpec(arr.shape, lambda i: (0, 0))

    w_elems = hid * K + hid + 2 * (hid * hid + hid) + out_dim * hid + out_dim
    flops = 2 * Bp * (K * hid + 2 * hid * hid + hid * out_dim)
    bytes_accessed = 4 * (Bp * (_round_up(K, 8) + _round_up(out_dim, 8)) + w_elems)

    out = pl.pallas_call(
        kernel,
        out_shape=jax.ShapeDtypeStruct((out_dim, Bp), jnp.float32),
        grid_spec=pltpu.PrefetchScalarGridSpec(
            num_scalar_prefetch=0,
            grid=grid,
            in_specs=[
                batch_spec(K),                      # x_cat (feat+act, TB)
                resident_spec(params["w1_t"]),
                resident_spec(params["b1_t"]),
                resident_spec(params["w2_t"]),
                resident_spec(params["b2_t"]),
                resident_spec(params["w3_t"]),
                resident_spec(params["b3_t"]),
                resident_spec(params["w4_t"]),
                resident_spec(params["b4_t"]),
            ],
            out_specs=batch_spec(out_dim),          # (out_dim, TB) — lane-dense
        ),
        compiler_params=pltpu.CompilerParams(
            dimension_semantics=("parallel",),       # v7x: shard batch across both TCs
            vmem_limit_bytes=16 * 1024 * 1024,       # explicit, fits v5e scoped default
        ),
        cost_estimate=pl.CostEstimate(
            flops=flops, transcendentals=0, bytes_accessed=bytes_accessed),
    )(x_cat_t,
      params["w1_t"], params["b1_t"],
      params["w2_t"], params["b2_t"],
      params["w3_t"], params["b3_t"],
      params["w4_t"], params["b4_t"])

    return out[:, :B] if Bp != B else out


# ----------------------------------------------------------------------------
# Module-equivalent wrapper
# ----------------------------------------------------------------------------
class DynamicsPallas:
    def __init__(self, env_params, key):
        self.max_action = env_params["action_max"]
        self.n_object = env_params["n_object"]
        grip = env_params["grip"]
        n = self.n_object
        act = env_params["action"]
        hid = env_params["hidden_unit"]

        in_dim = 2 * grip + 3 * n + act + 4     # fc1 input (concat of x_sel and actions)
        feat_dim = 2 * grip + 3 * n + 4         # residual / output dim
        self.feat_dim = feat_dim
        self.act_dim = act

        # observation index gather (identical to the PyTorch module) — used by the
        # pure-JAX reference; the Pallas path uses the equivalent static slices.
        self._idx = np.concatenate([
            np.arange(0, 3 * n),
            np.arange(9 * n, 9 * n + 3),
            np.arange(12 * n + 3, 12 * n + 5),
            np.arange(15 * n + 10, 15 * n + 13),
            np.arange(18 * n + 13, 18 * n + 15),
        ])
        assert self._idx.shape[0] == feat_dim, "grip must be 3 for idx to match fc dims"

        # deterministic parameter init (synthetic; no checkpoint load)
        ks = jax.random.split(key, 8)

        def init_w(k, fan_in, fan_out):
            bound = 1.0 / np.sqrt(fan_in)
            return jax.random.uniform(k, (fan_in, fan_out), jnp.float32, -bound, bound)

        def init_b(k, fan_in, fan_out):
            bound = 1.0 / np.sqrt(fan_in)
            return jax.random.uniform(k, (1, fan_out), jnp.float32, -bound, bound)

        w1 = init_w(ks[0], in_dim, hid)
        b1 = init_b(ks[1], in_dim, hid)
        w2 = init_w(ks[2], hid, hid);       b2 = init_b(ks[3], hid, hid)
        w3 = init_w(ks[4], hid, hid);       b3 = init_b(ks[5], hid, hid)
        w4 = init_w(ks[6], hid, feat_dim);  b4 = init_b(ks[7], hid, feat_dim)

        # original-layout params (reference path)
        self.params = {"w1": w1, "b1": b1, "w2": w2, "b2": b2,
                       "w3": w3, "b3": b3, "w4": w4, "b4": b4}

        # Pre-transposed params for the batch-on-lanes kernel; fold 1/max_action
        # into fc1's action columns once so the kernel needs no concat/scale split.
        scale = jnp.float32(1.0 / self.max_action)
        w1_scaled = jnp.concatenate([w1[:feat_dim, :], w1[feat_dim:, :] * scale], axis=0)
        self.params.update({
            "w1_t": jnp.asarray(w1_scaled.T),   # (hid, feat+act)
            "b1_t": jnp.asarray(b1.T),          # (hid, 1)
            "w2_t": jnp.asarray(w2.T),          # (hid, hid)
            "b2_t": jnp.asarray(b2.T),
            "w3_t": jnp.asarray(w3.T),
            "b3_t": jnp.asarray(b3.T),
            "w4_t": jnp.asarray(w4.T),          # (feat_dim, hid)
            "b4_t": jnp.asarray(b4.T),          # (feat_dim, 1)
        })

    def forward(self, x, actions):
        # x: (B, obs_dim), actions: (B, action_dim) -> (B, feat_dim)
        n = self.n_object
        # 5 static contiguous slices (cheaper than a fancy-index gather) + actions,
        # then one transpose so the batch sits on the 128-lane axis.
        x_cat = jnp.concatenate([
            x[:, 0:3 * n],
            x[:, 9 * n:9 * n + 3],
            x[:, 12 * n + 3:12 * n + 5],
            x[:, 15 * n + 10:15 * n + 13],
            x[:, 18 * n + 13:18 * n + 15],
            actions,                            # 1/max_action already folded into w1_t
        ], axis=1)                              # (B, feat+act)
        out_t = _dynamics_mlp_pallas(x_cat.T, self.params, self.feat_dim)
        return out_t.T                          # back to (B, feat_dim)

    # pure-JAX reference (faithful to the PyTorch module) for correctness check
    def forward_ref(self, x, actions):
        p = self.params
        x_sel = x[:, self._idx]
        x_prev = x_sel
        h = jnp.concatenate([x_sel, actions / self.max_action], axis=1)
        h = jax.nn.relu(h @ p["w1"] + p["b1"])
        h = jax.nn.relu(h @ p["w2"] + p["b2"])
        h = jax.nn.relu(h @ p["w3"] + p["b3"])
        diff = h @ p["w4"] + p["b4"]
        return diff + x_prev


if __name__ == "__main__":
    env_params = {
        "action_max": 1.0,
        "n_object": 2,       # feat_dim = 3*2 + 10 = 16
        "grip": 3,           # required so 2*grip + 3*n + 4 == len(_idx)
        "action": 4,
        "hidden_unit": 32,
    }
    obs_dim = 18 * env_params["n_object"] + 15   # = 51, covers all gather indices

    key = jax.random.PRNGKey(0)
    k_param, k_x, k_a = jax.random.split(key, 3)

    model = DynamicsPallas(env_params, k_param)

    # small primary check (B=2)
    B = 2
    x = jax.random.normal(k_x, (B, obs_dim), jnp.float32)
    actions = jax.random.normal(k_a, (B, env_params["action"]), jnp.float32)
    out = jax.block_until_ready(model.forward(x, actions))
    ref = jax.block_until_ready(model.forward_ref(x, actions))
    np.testing.assert_allclose(np.asarray(out), np.asarray(ref), rtol=1e-5, atol=1e-5)

    # secondary check exercising the multi-tile / padded-batch path (B=300 -> 2 tiles)
    B2 = 300
    k_x2, k_a2 = jax.random.split(k_x)
    x2 = jax.random.normal(k_x2, (B2, obs_dim), jnp.float32)
    a2 = jax.random.normal(k_a2, (B2, env_params["action"]), jnp.float32)
    out2 = jax.block_until_ready(model.forward(x2, a2))
    ref2 = jax.block_until_ready(model.forward_ref(x2, a2))
    np.testing.assert_allclose(np.asarray(out2), np.asarray(ref2), rtol=1e-5, atol=1e-5)

    print("KERNEL_OK")
</pallas_src>

<mosaic_0001>
module attributes {stable_mosaic.version = 11 : i64} {
  func.func @kernel(%arg0: i32, %arg1: memref<20x128xf32, #tpu.memory_space<vmem>>, %arg2: memref<32x20xf32, #tpu.memory_space<vmem>>, %arg3: memref<32x1xf32, #tpu.memory_space<vmem>>, %arg4: memref<32x32xf32, #tpu.memory_space<vmem>>, %arg5: memref<32x1xf32, #tpu.memory_space<vmem>>, %arg6: memref<32x32xf32, #tpu.memory_space<vmem>>, %arg7: memref<32x1xf32, #tpu.memory_space<vmem>>, %arg8: memref<16x32xf32, #tpu.memory_space<vmem>>, %arg9: memref<16x1xf32, #tpu.memory_space<vmem>>, %arg10: memref<16x128xf32, #tpu.memory_space<vmem>>) attributes {dimension_semantics = [#tpu.dimension_semantics<parallel>], iteration_bounds = array<i64: 1>, scalar_prefetch = 0 : i64, scratch_operands = 0 : i64, tpu.core_type = #tpu.core_type<tc>, window_params = [{transform_indices = @transform_0, window_bounds = array<i64: 20, 128>}, {pipeline_mode = #tpu.pipeline_mode<synchronous>, transform_indices = @transform_1, window_bounds = array<i64: 32, 20>}, {pipeline_mode = #tpu.pipeline_mode<synchronous>, transform_indices = @transform_2, window_bounds = array<i64: 32, 1>}, {pipeline_mode = #tpu.pipeline_mode<synchronous>, transform_indices = @transform_3, window_bounds = array<i64: 32, 32>}, {pipeline_mode = #tpu.pipeline_mode<synchronous>, transform_indices = @transform_4, window_bounds = array<i64: 32, 1>}, {pipeline_mode = #tpu.pipeline_mode<synchronous>, transform_indices = @transform_5, window_bounds = array<i64: 32, 32>}, {pipeline_mode = #tpu.pipeline_mode<synchronous>, transform_indices = @transform_6, window_bounds = array<i64: 32, 1>}, {pipeline_mode = #tpu.pipeline_mode<synchronous>, transform_indices = @transform_7, window_bounds = array<i64: 16, 32>}, {pipeline_mode = #tpu.pipeline_mode<synchronous>, transform_indices = @transform_8, window_bounds = array<i64: 16, 1>}, {transform_indices = @transform_9, window_bounds = array<i64: 16, 128>}]} {
    %c0 = arith.constant 0 : index
    %c0_0 = arith.constant 0 : index
    %0 = vector.load %arg1[%c0, %c0_0] : memref<20x128xf32, #tpu.memory_space<vmem>>, vector<20x128xf32>
    %c0_1 = arith.constant 0 : index
    %c0_2 = arith.constant 0 : index
    %1 = vector.load %arg2[%c0_1, %c0_2] : memref<32x20xf32, #tpu.memory_space<vmem>>, vector<32x20xf32>
    %cst = arith.constant dense<0.000000e+00> : vector<32x128xf32>
    %2 = tpu.matmul %1, %0, %cst {dimension_numbers = #tpu.dot_dimension_numbers<[1], [0], [0], [1], [0, 0, 1, 1], [], []>} : vector<32x20xf32>, vector<20x128xf32>, vector<32x128xf32> -> vector<32x128xf32>
    %c0_3 = arith.constant 0 : index
    %c0_4 = arith.constant 0 : index
    %3 = vector.load %arg3[%c0_3, %c0_4] : memref<32x1xf32, #tpu.memory_space<vmem>>, vector<32x1xf32>
    %4 = vector.broadcast %3 : vector<32x1xf32> to vector<32x128xf32>
    %5 = arith.addf %2, %4 : vector<32x128xf32>
    %cst_5 = arith.constant 0.000000e+00 : f32
    %6 = vector.broadcast %cst_5 : f32 to vector<32x128xf32>
    %7 = arith.maximumf %5, %6 : vector<32x128xf32>
    %c0_6 = arith.constant 0 : index
    %c0_7 = arith.constant 0 : index
    %8 = vector.load %arg4[%c0_6, %c0_7] : memref<32x32xf32, #tpu.memory_space<vmem>>, vector<32x32xf32>
    %cst_8 = arith.constant dense<0.000000e+00> : vector<32x128xf32>
    %9 = tpu.matmul %8, %7, %cst_8 {dimension_numbers = #tpu.dot_dimension_numbers<[1], [0], [0], [1], [0, 0, 1, 1], [], []>} : vector<32x32xf32>, vector<32x128xf32>, vector<32x128xf32> -> vector<32x128xf32>
    %c0_9 = arith.constant 0 : index
    %c0_10 = arith.constant 0 : index
    %10 = vector.load %arg5[%c0_9, %c0_10] : memref<32x1xf32, #tpu.memory_space<vmem>>, vector<32x1xf32>
    %11 = vector.broadcast %10 : vector<32x1xf32> to vector<32x128xf32>
    %12 = arith.addf %9, %11 : vector<32x128xf32>
    %cst_11 = arith.constant 0.000000e+00 : f32
    %13 = vector.broadcast %cst_11 : f32 to vector<32x128xf32>
    %14 = arith.maximumf %12, %13 : vector<32x128xf32>
    %c0_12 = arith.constant 0 : index
    %c0_13 = arith.constant 0 : index
    %15 = vector.load %arg6[%c0_12, %c0_13] : memref<32x32xf32, #tpu.memory_space<vmem>>, vector<32x32xf32>
    %cst_14 = arith.constant dense<0.000000e+00> : vector<32x128xf32>
    %16 = tpu.matmul %15, %14, %cst_14 {dimension_numbers = #tpu.dot_dimension_numbers<[1], [0], [0], [1], [0, 0, 1, 1], [], []>} : vector<32x32xf32>, vector<32x128xf32>, vector<32x128xf32> -> vector<32x128xf32>
    %c0_15 = arith.constant 0 : index
    %c0_16 = arith.constant 0 : index
    %17 = vector.load %arg7[%c0_15, %c0_16] : memref<32x1xf32, #tpu.memory_space<vmem>>, vector<32x1xf32>
    %18 = vector.broadcast %17 : vector<32x1xf32> to vector<32x128xf32>
    %19 = arith.addf %16, %18 : vector<32x128xf32>
    %cst_17 = arith.constant 0.000000e+00 : f32
    %20 = vector.broadcast %cst_17 : f32 to vector<32x128xf32>
    %21 = arith.maximumf %19, %20 : vector<32x128xf32>
    %c0_18 = arith.constant 0 : index
    %c0_19 = arith.constant 0 : index
    %22 = vector.load %arg8[%c0_18, %c0_19] : memref<16x32xf32, #tpu.memory_space<vmem>>, vector<16x32xf32>
    %cst_20 = arith.constant dense<0.000000e+00> : vector<16x128xf32>
    %23 = tpu.matmul %22, %21, %cst_20 {dimension_numbers = #tpu.dot_dimension_numbers<[1], [0], [0], [1], [0, 0, 1, 1], [], []>} : vector<16x32xf32>, vector<32x128xf32>, vector<16x128xf32> -> vector<16x128xf32>
    %c0_21 = arith.constant 0 : index
    %c0_22 = arith.constant 0 : index
    %24 = vector.load %arg9[%c0_21, %c0_22] : memref<16x1xf32, #tpu.memory_space<vmem>>, vector<16x1xf32>
    %25 = vector.broadcast %24 : vector<16x1xf32> to vector<16x128xf32>
    %26 = arith.addf %23, %25 : vector<16x128xf32>
    %27 = vector.extract_strided_slice %0 {offsets = [0, 0], sizes = [16, 128], strides = [1, 1]} : vector<20x128xf32> to vector<16x128xf32>
    %28 = arith.addf %26, %27 : vector<16x128xf32>
    %c0_23 = arith.constant 0 : index
    %c0_24 = arith.constant 0 : index
    %29 = vector.load %arg10[%c0_23, %c0_24] : memref<16x128xf32, #tpu.memory_space<vmem>>, vector<16x128xf32>
    tpu.vector_store %arg10[%c0_23, %c0_24], %28 {strides = array<i32>} : memref<16x128xf32, #tpu.memory_space<vmem>>, vector<16x128xf32>,
    return
  }
  func.func @transform_0(%arg0: i32) -> (i32, i32) {
    %c0_i32 = arith.constant 0 : i32
    %c0_i32_0 = arith.constant 0 : i32
    return %c0_i32, %arg0 : i32, i32
  }
  func.func @transform_1(%arg0: i32) -> (i32, i32) {
    %c0_i32 = arith.constant 0 : i32
    %c0_i32_0 = arith.constant 0 : i32
    %c0_i32_1 = arith.constant 0 : i32
    return %c0_i32, %c0_i32_0 : i32, i32
  }
  func.func @transform_2(%arg0: i32) -> (i32, i32) {
    %c0_i32 = arith.constant 0 : i32
    %c0_i32_0 = arith.constant 0 : i32
    %c0_i32_1 = arith.constant 0 : i32
    return %c0_i32, %c0_i32_0 : i32, i32
  }
  func.func @transform_3(%arg0: i32) -> (i32, i32) {
    %c0_i32 = arith.constant 0 : i32
    %c0_i32_0 = arith.constant 0 : i32
    %c0_i32_1 = arith.constant 0 : i32
    return %c0_i32, %c0_i32_0 : i32, i32
  }
  func.func @transform_4(%arg0: i32) -> (i32, i32) {
    %c0_i32 = arith.constant 0 : i32
    %c0_i32_0 = arith.constant 0 : i32
    %c0_i32_1 = arith.constant 0 : i32
    return %c0_i32, %c0_i32_0 : i32, i32
  }
  func.func @transform_5(%arg0: i32) -> (i32, i32) {
    %c0_i32 = arith.constant 0 : i32
    %c0_i32_0 = arith.constant 0 : i32
    %c0_i32_1 = arith.constant 0 : i32
    return %c0_i32, %c0_i32_0 : i32, i32
  }
  func.func @transform_6(%arg0: i32) -> (i32, i32) {
    %c0_i32 = arith.constant 0 : i32
    %c0_i32_0 = arith.constant 0 : i32
    %c0_i32_1 = arith.constant 0 : i32
    return %c0_i32, %c0_i32_0 : i32, i32
  }
  func.func @transform_7(%arg0: i32) -> (i32, i32) {
    %c0_i32 = arith.constant 0 : i32
    %c0_i32_0 = arith.constant 0 : i32
    %c0_i32_1 = arith.constant 0 : i32
    return %c0_i32, %c0_i32_0 : i32, i32
  }
  func.func @transform_8(%arg0: i32) -> (i32, i32) {
    %c0_i32 = arith.constant 0 : i32
    %c0_i32_0 = arith.constant 0 : i32
    %c0_i32_1 = arith.constant 0 : i32
    return %c0_i32, %c0_i32_0 : i32, i32
  }
  func.func @transform_9(%arg0: i32) -> (i32, i32) {
    %c0_i32 = arith.constant 0 : i32
    %c0_i32_0 = arith.constant 0 : i32
    return %c0_i32, %arg0 : i32, i32
  }
}

</mosaic_0001>

<llo_original>
// kernel: tpu_custom_call.1
$region0: #{tpu_custom_call.1}
  #allocation0 [shape = 'u32[]', space=smem, size = 0x4, offset = 0x4, fixed_abs, tag = 'smem constant byte address 0x4 - core index']
  #allocation1 [shape = 'u32[144,128]{1,0:T(1,128)}', space=vmem, size = 0x12000, scoped, tag = 'internal scratch']
  %s0 = inlined_call_operand.vmem [shape: f32[20,128], index: 0, kind: input, shape index: {}]
  %s1 = inlined_call_operand.vmem [shape: f32[32,20], index: 1, kind: input, shape index: {}]
  %s2 = inlined_call_operand.vmem [shape: f32[32,1], index: 2, kind: input, shape index: {}]
  %s3 = inlined_call_operand.vmem [shape: f32[32,32], index: 3, kind: input, shape index: {}]
  %s4 = inlined_call_operand.vmem [shape: f32[32,1], index: 4, kind: input, shape index: {}]
  %s5 = inlined_call_operand.vmem [shape: f32[32,32], index: 5, kind: input, shape index: {}]
  %s6 = inlined_call_operand.vmem [shape: f32[32,1], index: 6, kind: input, shape index: {}]
  %s7 = inlined_call_operand.vmem [shape: f32[16,32], index: 7, kind: input, shape index: {}]
  %s8 = inlined_call_operand.vmem [shape: f32[16,1], index: 8, kind: input, shape index: {}]
  %s9 = inlined_call_operand.hbm [shape: f32[16,128], index: 9, kind: output, shape index: {}]
  %s10 = sld [smem:[#allocation0]]
  $region46: #{tpu_custom_call.1} parent=0
    _
  %s12 = ssub.s32 1, %s10
  %s13 = scalar_select 0, %s12, %s10
  $region1: #{tpu_custom_call.1} parent=0
    #allocation2 [shape = 'u8[8192]{0}', space=vmem, size = 0x2000, scoped, tag = 'output window, operand 0, single buffered']
    #allocation3 [shape = 's32[1]{0}', space=sflag, size = 0x4, scoped, tag = 'scoped memory for tpu_custom_call.1']
    %14 = vsyncpa [#allocation3], 0
    // Predicated region
    $region2: #{tpu_custom_call.1} parent=1 // pred_check
      _
    $region3: #{tpu_custom_call.1} parent=1 // pred_check_branch
      %16 = sbr.rel (0) target = $region5
    $region4: #{tpu_custom_call.1} parent=1 // pred_region
      _
    $region5: #{tpu_custom_call.1} parent=1 // pred_fallthru
      _
    // Predicated region
    $region6: #{tpu_custom_call.1} parent=1 // pred_check
      _
    $region7: #{tpu_custom_call.1} parent=1 // pred_check_branch
      %18 = sbr.rel (0) target = $region9
    $region8: #{tpu_custom_call.1} parent=1 // pred_region
      _
    $region9: #{tpu_custom_call.1} parent=1 // pred_fallthru
      _
    // Predicated region
    $region10: #{tpu_custom_call.1} parent=1 // pred_check
      _
    $region11: #{tpu_custom_call.1} parent=1 // pred_check_branch
      %20 = sbr.rel (0) target = $region13
    $region12: #{tpu_custom_call.1} parent=1 // pred_region
      _
    $region13: #{tpu_custom_call.1} parent=1 // pred_fallthru
      _
    // Predicated region
    $region14: #{tpu_custom_call.1} parent=1 // pred_check
      _
    $region15: #{tpu_custom_call.1} parent=1 // pred_check_branch
      %22 = sbr.rel (0) target = $region17
    $region16: #{tpu_custom_call.1} parent=1 // pred_region
      _
    $region17: #{tpu_custom_call.1} parent=1 // pred_fallthru
      _
    // Predicated region
    $region18: #{tpu_custom_call.1} parent=1 // pred_check
      _
    $region19: #{tpu_custom_call.1} parent=1 // pred_check_branch
      %24 = sbr.rel (0) target = $region21
    $region20: #{tpu_custom_call.1} parent=1 // pred_region
      _
    $region21: #{tpu_custom_call.1} parent=1 // pred_fallthru
      _
    // Predicated region
    $region22: #{tpu_custom_call.1} parent=1 // pred_check
      _
    $region23: #{tpu_custom_call.1} parent=1 // pred_check_branch
      %26 = sbr.rel (0) target = $region25
    $region24: #{tpu_custom_call.1} parent=1 // pred_region
      _
    $region25: #{tpu_custom_call.1} parent=1 // pred_fallthru
      _
    // Predicated region
    $region26: #{tpu_custom_call.1} parent=1 // pred_check
      _
    $region27: #{tpu_custom_call.1} parent=1 // pred_check_branch
      %28 = sbr.rel (0) target = $region29
    $region28: #{tpu_custom_call.1} parent=1 // pred_region
      _
    $region29: #{tpu_custom_call.1} parent=1 // pred_fallthru
      _
    // Predicated region
    $region30: #{tpu_custom_call.1} parent=1 // pred_check
      _
    $region31: #{tpu_custom_call.1} parent=1 // pred_check_branch
      %30 = sbr.rel (0) target = $region33
    $region32: #{tpu_custom_call.1} parent=1 // pred_region
      _
    $region33: #{tpu_custom_call.1} parent=1 // pred_fallthru
      _
    // Predicated region
    $region34: #{tpu_custom_call.1} parent=1 // pred_check
      _
    $region35: #{tpu_custom_call.1} parent=1 // pred_check_branch
      %32 = sbr.rel (0) target = $region37
    $region36: #{tpu_custom_call.1} parent=1 // pred_region
      _
    $region37: #{tpu_custom_call.1} parent=1 // pred_fallthru
      _
    %v33 = vld [vmem:[%s0] sm:$0xff]
    %v34 = vld [vmem:[%s0 + $0x8] sm:$0xff]
    %v35 = vld [vmem:[%s0 + $0x10] sm:$0xf]
    %v36 = vld [vmem:[%s1] sm:$0xff]
    %v37 = vld [vmem:[%s1 + $0x8] sm:$0xff]
    %v38 = vld [vmem:[%s1 + $0x10] sm:$0xff]
    %v39 = vld [vmem:[%s1 + $0x18] sm:$0xff]
    %v40 = vld [vmem:[%s2] sm:$0xff]
    %v41 = vld [vmem:[%s2 + $0x8] sm:$0xff]
    %v42 = vld [vmem:[%s2 + $0x10] sm:$0xff]
    %v43 = vld [vmem:[%s2 + $0x18] sm:$0xff]
    %45 = vset.pattern.permute.xlu0 0
    %46 = vperm.xlu0 %45, %v40
    %v47 = vpop.permute.xlu0 %46
    %50 = vset.pattern.permute.xlu0 0
    %51 = vperm.xlu0 %50, %v41
    %v52 = vpop.permute.xlu0 %51
    %55 = vset.pattern.permute.xlu0 0
    %56 = vperm.xlu0 %55, %v42
    %v57 = vpop.permute.xlu0 %56
    %60 = vset.pattern.permute.xlu0 0
    %61 = vperm.xlu0 %60, %v43
    %v62 = vpop.permute.xlu0 %61
    %vm64 = vcmask 162816
    %v66 = vsel %vm64, %v36, 0
    %v69 = vsel %vm64, %v37, 0
    %v72 = vsel %vm64, %v38, 0
    %v75 = vsel %vm64, %v39, 0
    %vm77 = vcmask 1043456
    %v79 = vsel %vm77, %v35, 0
    %81 = vmatprep.subr.mxu0 0.0
    %82 = vmatpush1.msra.mxu0 0.0
    %83 = vmatprep.subr.mxu0 0.0
    %84 = vmatpush1.msra.mxu0 0.0
    %85 = vmatprep.subr.mxu0 0.0
    %86 = vmatpush1.msra.mxu0 0.0
    %87 = vmatprep.subr.mxu0 0.0
    %88 = vmatpush1.msra.mxu0 0.0
    %89 = vmatprep.subr.mxu0 0.0
    %90 = vmatpush1.msra.mxu0 0.0
    %91 = vmatprep.subr.mxu0 0.0
    %92 = vmatpush1.msra.mxu0 0.0
    %93 = vmatprep.subr.mxu0 0.0
    %94 = vmatpush1.msra.mxu0 0.0
    %95 = vmatprep.subr.mxu0 0.0
    %96 = vmatpush1.msra.mxu0 0.0
    %97 = vmatprep.subr.mxu0 0.0
    %98 = vmatpush1.msra.mxu0 0.0
    %99 = vmatprep.subr.mxu0 0.0
    %100 = vmatpush1.msra.mxu0 0.0
    %101 = vmatprep.subr.mxu0 0.0
    %102 = vmatpush1.msra.mxu0 0.0
    %103 = vmatprep.subr.mxu0 0.0
    %104 = vmatpush1.msra.mxu0 0.0
    %105 = vmatprep.subr.mxu0 0.0
    %106 = vmatpush1.msra.mxu0 0.0
    %107 = vmatprep.subr.mxu0 0.0
    %108 = vmatpush1.msra.mxu0 %v79
    %109 = vmatprep.subr.mxu0 0.0
    %110 = vmatpush1.msra.mxu0 %v34
    %111 = vmatprep.subr.mxu0 0.0
    %112 = vmatpush1.msra.mxu0 %v33
    %113 = vmatprep.subr.mxu0 0.0
    %114 = vmatpush2.msra.mxu0 0.0
    %115 = vmatprep.subr.mxu0 0.0
    %116 = vmatpush2.msra.mxu0 0.0
    %117 = vmatprep.subr.mxu0 0.0
    %118 = vmatpush2.msra.mxu0 0.0
    %119 = vmatprep.subr.mxu0 0.0
    %120 = vmatpush2.msra.mxu0 0.0
    %121 = vmatprep.subr.mxu0 0.0
    %122 = vmatpush2.msra.mxu0 0.0
    %123 = vmatprep.subr.mxu0 0.0
    %124 = vmatpush2.msra.mxu0 0.0
    %125 = vmatprep.subr.mxu0 0.0
    %126 = vmatpush2.msra.mxu0 0.0
    %127 = vmatprep.subr.mxu0 0.0
    %128 = vmatpush2.msra.mxu0 0.0
    %129 = vmatprep.subr.mxu0 0.0
    %130 = vmatpush2.msra.mxu0 0.0
    %131 = vmatprep.subr.mxu0 0.0
    %132 = vmatpush2.msra.mxu0 0.0
    %133 = vmatprep.subr.mxu0 0.0
    %134 = vmatpush2.msra.mxu0 0.0
    %135 = vmatprep.subr.mxu0 0.0
    %136 = vmatpush2.msra.mxu0 0.0
    %137 = vmatprep.subr.mxu0 0.0
    %138 = vmatpush2.msra.mxu0 0.0
    %139 = vmatprep.subr.mxu0 0.0
    %140 = vmatpush2.msra.mxu0 0.0
    %141 = vmatprep.subr.mxu0 0.0
    %142 = vmatpush2.msra.mxu0 0.0
    %143 = vmatprep.subr.mxu0 0.0
    %144 = vmatpush2.msra.mxu0 0.0
    %145 = vmatprep.mubr.f32.mxu0 0.0
    %146 = vmatmul.mubr.f32.gmra.mxu0 %v66
    %v147 = vpop.f32.mrf.mxu0
    %v148 = vadd.f32 %v47, %v147
    %v149 = vpop.f32.mrf.mxu0
    %150 = vmatprep.mubr.f32.mxu0 0.0
    %151 = vmatmul.mubr.f32.gmra.mxu0 %v69
    %v152 = vpop.f32.mrf.mxu0
    %v153 = vadd.f32 %v52, %v152
    %v154 = vpop.f32.mrf.mxu0
    %155 = vmatprep.mubr.f32.mxu0 0.0
    %156 = vmatmul.mubr.f32.gmra.mxu0 %v72
    %v157 = vpop.f32.mrf.mxu0
    %v158 = vadd.f32 %v57, %v157
    %v159 = vpop.f32.mrf.mxu0
    %160 = vmatprep.mubr.f32.mxu0 0.0
    %161 = vmatmul.mubr.f32.gmra.mxu0 %v75
    %v162 = vpop.f32.mrf.mxu0
    %v163 = vadd.f32 %v62, %v162
    %v164 = vpop.f32.mrf.mxu0
    %165 = vdwg.mxu0
    %v166 = vmax.f32 %v148, 0.0
    %v167 = vmax.f32 %v153, 0.0
    %v168 = vmax.f32 %v158, 0.0
    %v169 = vmax.f32 %v163, 0.0
    %v170 = vld [vmem:[%s3] sm:$0xff]
    %v171 = vld [vmem:[%s3 + $0x8] sm:$0xff]
    %v172 = vld [vmem:[%s3 + $0x10] sm:$0xff]
    %v173 = vld [vmem:[%s3 + $0x18] sm:$0xff]
    %v174 = vld [vmem:[%s4] sm:$0xff]
    %v175 = vld [vmem:[%s4 + $0x8] sm:$0xff]
    %v176 = vld [vmem:[%s4 + $0x10] sm:$0xff]
    %v177 = vld [vmem:[%s4 + $0x18] sm:$0xff]
    %179 = vset.pattern.permute.xlu0 0
    %180 = vperm.xlu0 %179, %v174
    %v181 = vpop.permute.xlu0 %180
    %184 = vset.pattern.permute.xlu0 0
    %185 = vperm.xlu0 %184, %v175
    %v186 = vpop.permute.xlu0 %185
    %189 = vset.pattern.permute.xlu0 0
    %190 = vperm.xlu0 %189, %v176
    %v191 = vpop.permute.xlu0 %190
    %194 = vset.pattern.permute.xlu0 0
    %195 = vperm.xlu0 %194, %v177
    %v196 = vpop.permute.xlu0 %195
    %vm198 = vcmask 261120
    %v200 = vsel %vm198, %v170, 0
    %v203 = vsel %vm198, %v171, 0
    %v206 = vsel %vm198, %v172, 0
    %v209 = vsel %vm198, %v173, 0
    %211 = vmatprep.subr.mxu0 0.0
    %212 = vmatpush1.msra.mxu0 0.0
    %213 = vmatprep.subr.mxu0 0.0
    %214 = vmatpush1.msra.mxu0 0.0
    %215 = vmatprep.subr.mxu0 0.0
    %216 = vmatpush1.msra.mxu0 0.0
    %217 = vmatprep.subr.mxu0 0.0
    %218 = vmatpush1.msra.mxu0 0.0
    %219 = vmatprep.subr.mxu0 0.0
    %220 = vmatpush1.msra.mxu0 0.0
    %221 = vmatprep.subr.mxu0 0.0
    %222 = vmatpush1.msra.mxu0 0.0
    %223 = vmatprep.subr.mxu0 0.0
    %224 = vmatpush1.msra.mxu0 0.0
    %225 = vmatprep.subr.mxu0 0.0
    %226 = vmatpush1.msra.mxu0 0.0
    %227 = vmatprep.subr.mxu0 0.0
    %228 = vmatpush1.msra.mxu0 0.0
    %229 = vmatprep.subr.mxu0 0.0
    %230 = vmatpush1.msra.mxu0 0.0
    %231 = vmatprep.subr.mxu0 0.0
    %232 = vmatpush1.msra.mxu0 0.0
    %233 = vmatprep.subr.mxu0 0.0
    %234 = vmatpush1.msra.mxu0 0.0
    %235 = vmatprep.subr.mxu0 0.0
    %236 = vmatpush1.msra.mxu0 %v169
    %237 = vmatprep.subr.mxu0 0.0
    %238 = vmatpush1.msra.mxu0 %v168
    %239 = vmatprep.subr.mxu0 0.0
    %240 = vmatpush1.msra.mxu0 %v167
    %241 = vmatprep.subr.mxu0 0.0
    %242 = vmatpush1.msra.mxu0 %v166
    %243 = vmatprep.subr.mxu0 0.0
    %244 = vmatpush2.msra.mxu0 0.0
    %245 = vmatprep.subr.mxu0 0.0
    %246 = vmatpush2.msra.mxu0 0.0
    %247 = vmatprep.subr.mxu0 0.0
    %248 = vmatpush2.msra.mxu0 0.0
    %249 = vmatprep.subr.mxu0 0.0
    %250 = vmatpush2.msra.mxu0 0.0
    %251 = vmatprep.subr.mxu0 0.0
    %252 = vmatpush2.msra.mxu0 0.0
    %253 = vmatprep.subr.mxu0 0.0
    %254 = vmatpush2.msra.mxu0 0.0
    %255 = vmatprep.subr.mxu0 0.0
    %256 = vmatpush2.msra.mxu0 0.0
    %257 = vmatprep.subr.mxu0 0.0
    %258 = vmatpush2.msra.mxu0 0.0
    %259 = vmatprep.subr.mxu0 0.0
    %260 = vmatpush2.msra.mxu0 0.0
    %261 = vmatprep.subr.mxu0 0.0
    %262 = vmatpush2.msra.mxu0 0.0
    %263 = vmatprep.subr.mxu0 0.0
    %264 = vmatpush2.msra.mxu0 0.0
    %265 = vmatprep.subr.mxu0 0.0
    %266 = vmatpush2.msra.mxu0 0.0
    %267 = vmatprep.subr.mxu0 0.0
    %268 = vmatpush2.msra.mxu0 0.0
    %269 = vmatprep.subr.mxu0 0.0
    %270 = vmatpush2.msra.mxu0 0.0
    %271 = vmatprep.subr.mxu0 0.0
    %272 = vmatpush2.msra.mxu0 0.0
    %273 = vmatprep.subr.mxu0 0.0
    %274 = vmatpush2.msra.mxu0 0.0
    %275 = vmatprep.mubr.f32.mxu0 0.0
    %276 = vmatmul.mubr.f32.gmra.mxu0 %v200
    %v277 = vpop.f32.mrf.mxu0
    %v278 = vadd.f32 %v181, %v277
    %v279 = vpop.f32.mrf.mxu0
    %280 = vmatprep.mubr.f32.mxu0 0.0
    %281 = vmatmul.mubr.f32.gmra.mxu0 %v203
    %v282 = vpop.f32.mrf.mxu0
    %v283 = vadd.f32 %v186, %v282
    %v284 = vpop.f32.mrf.mxu0
    %285 = vmatprep.mubr.f32.mxu0 0.0
    %286 = vmatmul.mubr.f32.gmra.mxu0 %v206
    %v287 = vpop.f32.mrf.mxu0
    %v288 = vadd.f32 %v191, %v287
    %v289 = vpop.f32.mrf.mxu0
    %290 = vmatprep.mubr.f32.mxu0 0.0
    %291 = vmatmul.mubr.f32.gmra.mxu0 %v209
    %v292 = vpop.f32.mrf.mxu0
    %v293 = vadd.f32 %v196, %v292
    %v294 = vpop.f32.mrf.mxu0
    %295 = vdwg.mxu0
    %v296 = vmax.f32 %v278, 0.0
    %v297 = vmax.f32 %v283, 0.0
    %v298 = vmax.f32 %v288, 0.0
    %v299 = vmax.f32 %v293, 0.0
    %v300 = vld [vmem:[%s5] sm:$0xff]
    %v301 = vld [vmem:[%s5 + $0x8] sm:$0xff]
    %v302 = vld [vmem:[%s5 + $0x10] sm:$0xff]
    %v303 = vld [vmem:[%s5 + $0x18] sm:$0xff]
    %v304 = vld [vmem:[%s6] sm:$0xff]
    %v305 = vld [vmem:[%s6 + $0x8] sm:$0xff]
    %v306 = vld [vmem:[%s6 + $0x10] sm:$0xff]
    %v307 = vld [vmem:[%s6 + $0x18] sm:$0xff]
    %309 = vset.pattern.permute.xlu0 0
    %310 = vperm.xlu0 %309, %v304
    %v311 = vpop.permute.xlu0 %310
    %314 = vset.pattern.permute.xlu0 0
    %315 = vperm.xlu0 %314, %v305
    %v316 = vpop.permute.xlu0 %315
    %319 = vset.pattern.permute.xlu0 0
    %320 = vperm.xlu0 %319, %v306
    %v321 = vpop.permute.xlu0 %320
    %324 = vset.pattern.permute.xlu0 0
    %325 = vperm.xlu0 %324, %v307
    %v326 = vpop.permute.xlu0 %325
    %v329 = vsel %vm198, %v300, 0
    %v332 = vsel %vm198, %v301, 0
    %v335 = vsel %vm198, %v302, 0
    %v338 = vsel %vm198, %v303, 0
    %340 = vmatprep.subr.mxu0 0.0
    %341 = vmatpush1.msra.mxu0 0.0
    %342 = vmatprep.subr.mxu0 0.0
    %343 = vmatpush1.msra.mxu0 0.0
    %344 = vmatprep.subr.mxu0 0.0
    %345 = vmatpush1.msra.mxu0 0.0
    %346 = vmatprep.subr.mxu0 0.0
    %347 = vmatpush1.msra.mxu0 0.0
    %348 = vmatprep.subr.mxu0 0.0
    %349 = vmatpush1.msra.mxu0 0.0
    %350 = vmatprep.subr.mxu0 0.0
    %351 = vmatpush1.msra.mxu0 0.0
    %352 = vmatprep.subr.mxu0 0.0
    %353 = vmatpush1.msra.mxu0 0.0
    %354 = vmatprep.subr.mxu0 0.0
    %355 = vmatpush1.msra.mxu0 0.0
    %356 = vmatprep.subr.mxu0 0.0
    %357 = vmatpush1.msra.mxu0 0.0
    %358 = vmatprep.subr.mxu0 0.0
    %359 = vmatpush1.msra.mxu0 0.0
    %360 = vmatprep.subr.mxu0 0.0
    %361 = vmatpush1.msra.mxu0 0.0
    %362 = vmatprep.subr.mxu0 0.0
    %363 = vmatpush1.msra.mxu0 0.0
    %364 = vmatprep.subr.mxu0 0.0
    %365 = vmatpush1.msra.mxu0 %v299
    %366 = vmatprep.subr.mxu0 0.0
    %367 = vmatpush1.msra.mxu0 %v298
    %368 = vmatprep.subr.mxu0 0.0
    %369 = vmatpush1.msra.mxu0 %v297
    %370 = vmatprep.subr.mxu0 0.0
    %371 = vmatpush1.msra.mxu0 %v296
    %372 = vmatprep.subr.mxu0 0.0
    %373 = vmatpush2.msra.mxu0 0.0
    %374 = vmatprep.subr.mxu0 0.0
    %375 = vmatpush2.msra.mxu0 0.0
    %376 = vmatprep.subr.mxu0 0.0
    %377 = vmatpush2.msra.mxu0 0.0
    %378 = vmatprep.subr.mxu0 0.0
    %379 = vmatpush2.msra.mxu0 0.0
    %380 = vmatprep.subr.mxu0 0.0
    %381 = vmatpush2.msra.mxu0 0.0
    %382 = vmatprep.subr.mxu0 0.0
    %383 = vmatpush2.msra.mxu0 0.0
    %384 = vmatprep.subr.mxu0 0.0
    %385 = vmatpush2.msra.mxu0 0.0
    %386 = vmatprep.subr.mxu0 0.0
    %387 = vmatpush2.msra.mxu0 0.0
    %388 = vmatprep.subr.mxu0 0.0
    %389 = vmatpush2.msra.mxu0 0.0
    %390 = vmatprep.subr.mxu0 0.0
    %391 = vmatpush2.msra.mxu0 0.0
    %392 = vmatprep.subr.mxu0 0.0
    %393 = vmatpush2.msra.mxu0 0.0
    %394 = vmatprep.subr.mxu0 0.0
    %395 = vmatpush2.msra.mxu0 0.0
    %396 = vmatprep.subr.mxu0 0.0
    %397 = vmatpush2.msra.mxu0 0.0
    %398 = vmatprep.subr.mxu0 0.0
    %399 = vmatpush2.msra.mxu0 0.0
    %400 = vmatprep.subr.mxu0 0.0
    %401 = vmatpush2.msra.mxu0 0.0
    %402 = vmatprep.subr.mxu0 0.0
    %403 = vmatpush2.msra.mxu0 0.0
    %404 = vmatprep.mubr.f32.mxu0 0.0
    %405 = vmatmul.mubr.f32.gmra.mxu0 %v329
    %v406 = vpop.f32.mrf.mxu0
    %v407 = vadd.f32 %v311, %v406
    %v408 = vpop.f32.mrf.mxu0
    %409 = vmatprep.mubr.f32.mxu0 0.0
    %410 = vmatmul.mubr.f32.gmra.mxu0 %v332
    %v411 = vpop.f32.mrf.mxu0
    %v412 = vadd.f32 %v316, %v411
    %v413 = vpop.f32.mrf.mxu0
    %414 = vmatprep.mubr.f32.mxu0 0.0
    %415 = vmatmul.mubr.f32.gmra.mxu0 %v335
    %v416 = vpop.f32.mrf.mxu0
    %v417 = vadd.f32 %v321, %v416
    %v418 = vpop.f32.mrf.mxu0
    %419 = vmatprep.mubr.f32.mxu0 0.0
    %420 = vmatmul.mubr.f32.gmra.mxu0 %v338
    %v421 = vpop.f32.mrf.mxu0
    %v422 = vadd.f32 %v326, %v421
    %v423 = vpop.f32.mrf.mxu0
    %424 = vdwg.mxu0
    %v425 = vmax.f32 %v407, 0.0
    %v426 = vmax.f32 %v412, 0.0
    %v427 = vmax.f32 %v417, 0.0
    %v428 = vmax.f32 %v422, 0.0
    %v429 = vld [vmem:[%s7] sm:$0xff]
    %v430 = vld [vmem:[%s7 + $0x8] sm:$0xff]
    %v431 = vld [vmem:[%s8] sm:$0xff]
    %v432 = vld [vmem:[%s8 + $0x8] sm:$0xff]
    %434 = vset.pattern.permute.xlu0 0
    %435 = vperm.xlu0 %434, %v431
    %v436 = vpop.permute.xlu0 %435
    %439 = vset.pattern.permute.xlu0 0
    %440 = vperm.xlu0 %439, %v432
    %v441 = vpop.permute.xlu0 %440
    %v444 = vsel %vm198, %v429, 0
    %v447 = vsel %vm198, %v430, 0
    %449 = vmatprep.subr.mxu0 0.0
    %450 = vmatpush1.msra.mxu0 0.0
    %451 = vmatprep.subr.mxu0 0.0
    %452 = vmatpush1.msra.mxu0 0.0
    %453 = vmatprep.subr.mxu0 0.0
    %454 = vmatpush1.msra.mxu0 0.0
    %455 = vmatprep.subr.mxu0 0.0
    %456 = vmatpush1.msra.mxu0 0.0
    %457 = vmatprep.subr.mxu0 0.0
    %458 = vmatpush1.msra.mxu0 0.0
    %459 = vmatprep.subr.mxu0 0.0
    %460 = vmatpush1.msra.mxu0 0.0
    %461 = vmatprep.subr.mxu0 0.0
    %462 = vmatpush1.msra.mxu0 0.0
    %463 = vmatprep.subr.mxu0 0.0
    %464 = vmatpush1.msra.mxu0 0.0
    %465 = vmatprep.subr.mxu0 0.0
    %466 = vmatpush1.msra.mxu0 0.0
    %467 = vmatprep.subr.mxu0 0.0
    %468 = vmatpush1.msra.mxu0 0.0
    %469 = vmatprep.subr.mxu0 0.0
    %470 = vmatpush1.msra.mxu0 0.0
    %471 = vmatprep.subr.mxu0 0.0
    %472 = vmatpush1.msra.mxu0 0.0
    %473 = vmatprep.subr.mxu0 0.0
    %474 = vmatpush1.msra.mxu0 %v428
    %475 = vmatprep.subr.mxu0 0.0
    %476 = vmatpush1.msra.mxu0 %v427
    %477 = vmatprep.subr.mxu0 0.0
    %478 = vmatpush1.msra.mxu0 %v426
    %479 = vmatprep.subr.mxu0 0.0
    %480 = vmatpush1.msra.mxu0 %v425
    %481 = vmatprep.subr.mxu0 0.0
    %482 = vmatpush2.msra.mxu0 0.0
    %483 = vmatprep.subr.mxu0 0.0
    %484 = vmatpush2.msra.mxu0 0.0
    %485 = vmatprep.subr.mxu0 0.0
    %486 = vmatpush2.msra.mxu0 0.0
    %487 = vmatprep.subr.mxu0 0.0
    %488 = vmatpush2.msra.mxu0 0.0
    %489 = vmatprep.subr.mxu0 0.0
    %490 = vmatpush2.msra.mxu0 0.0
    %491 = vmatprep.subr.mxu0 0.0
    %492 = vmatpush2.msra.mxu0 0.0
    %493 = vmatprep.subr.mxu0 0.0
    %494 = vmatpush2.msra.mxu0 0.0
    %495 = vmatprep.subr.mxu0 0.0
    %496 = vmatpush2.msra.mxu0 0.0
    %497 = vmatprep.subr.mxu0 0.0
    %498 = vmatpush2.msra.mxu0 0.0
    %499 = vmatprep.subr.mxu0 0.0
    %500 = vmatpush2.msra.mxu0 0.0
    %501 = vmatprep.subr.mxu0 0.0
    %502 = vmatpush2.msra.mxu0 0.0
    %503 = vmatprep.subr.mxu0 0.0
    %504 = vmatpush2.msra.mxu0 0.0
    %505 = vmatprep.subr.mxu0 0.0
    %506 = vmatpush2.msra.mxu0 0.0
    %507 = vmatprep.subr.mxu0 0.0
    %508 = vmatpush2.msra.mxu0 0.0
    %509 = vmatprep.subr.mxu0 0.0
    %510 = vmatpush2.msra.mxu0 0.0
    %511 = vmatprep.subr.mxu0 0.0
    %512 = vmatpush2.msra.mxu0 0.0
    %513 = vmatprep.mubr.f32.mxu0 0.0
    %514 = vmatmul.mubr.f32.gmra.mxu0 %v444
    %v515 = vpop.f32.mrf.mxu0
    %v516 = vadd.f32 %v436, %v515
    %v517 = vpop.f32.mrf.mxu0
    %518 = vmatprep.mubr.f32.mxu0 0.0
    %519 = vmatmul.mubr.f32.gmra.mxu0 %v447
    %v520 = vpop.f32.mrf.mxu0
    %v521 = vadd.f32 %v441, %v520
    %v522 = vpop.f32.mrf.mxu0
    %523 = vdwg.mxu0
    %v524 = vadd.f32 %v516, %v33
    %v525 = vadd.f32 %v521, %v34
    %526 = vst [vmem:[#allocation2] sm:$0xff] %v524
    %527 = vst [vmem:[#allocation2 + $0x8] sm:$0xff] %v525
    // Predicated region
    $region38: #{tpu_custom_call.1} parent=1 // pred_check
      _
    $region39: #{tpu_custom_call.1} parent=1 // pred_check_branch
      %529 = sbr.rel (0) target = $region41
    $region40: #{tpu_custom_call.1} parent=1 // pred_region
      %s531 = ssub.s32 256, 256
      %532 = vsyncadd [#allocation3], %s531
      %s533 = sshll.u32 [#allocation2], 4
      %s534 = int_to_ptr.vmem [resolvable:$true] %s533
      %539 = dma.vmem_to_hbm [thread:$0]  %s534, 256, %s9, [#allocation3], 128, 128, 8
    $region41: #{tpu_custom_call.1} parent=1 // pred_fallthru
      _
    // Predicated region
    $region42: #{tpu_custom_call.1} parent=1 // pred_check
      _
    $region43: #{tpu_custom_call.1} parent=1 // pred_check_branch
      %541 = sbr.rel (0) target = $region45
    $region44: #{tpu_custom_call.1} parent=1 // pred_region
      %542 = dma.done [#allocation3], 256
    $region45: #{tpu_custom_call.1} parent=1 // pred_fallthru
      _
    %543 = vsyncpa [#allocation3], 1

</llo_original>
